<compile_context>
chip_gen: v7x
topology: tpu7x:2x2x1
jax: 0.10.0
libtpu: 0.0.40
codegen_flags: <defaults>
</compile_context>

<pallas_src>
import math
import functools

import jax
import jax.numpy as jnp
from jax.experimental import pallas as pl
from jax.experimental.pallas import tpu as pltpu

_LANE = 128
_TARGET_BLOCK_BYTES = 4 * 1024 * 1024   # ~4 MiB blocks -> ~85%+ of HBM roofline
_VMEM_LIMIT_BYTES = 32 * 1024 * 1024    # > v5e's 16 MiB scoped default, < v7x's 64 MiB physical


def _identity_kernel(x_ref, o_ref):
    # PcaModel.forward(x) == x : element-wise pass-through of the current tile.
    o_ref[...] = x_ref[...]


def _pick_layout(shape, itemsize):
    """Choose a lane-dense (rows, cols) view of x and a block_rows for the copy."""
    total = math.prod(shape)
    last_dim = shape[-1]

    if total % _LANE == 0:
        # Lane-dense relayout: last dim a large multiple of 128 -> unmasked stores.
        cols = _LANE
        for cand in (16384, 8192, 4096, 2048, 1024, 512, 256, 128):
            if total % cand == 0:
                cols = cand
                break
    else:
        # Fallback: keep the natural [batch, features] layout (full last dim).
        cols = last_dim
    rows = total // cols

    block_rows = max(1, _TARGET_BLOCK_BYTES // (cols * itemsize))
    if block_rows >= 32:
        # 32 is a multiple of every dtype's sublane requirement (8/16/32).
        block_rows = (block_rows // 32) * 32
    if block_rows >= rows or block_rows < 32:
        block_rows = rows  # full extent is always a legal block dim
    return rows, cols, block_rows


def _identity_copy(x):
    if x.ndim == 0 or x.size == 0:
        return x
    itemsize = jnp.dtype(x.dtype).itemsize
    rows, cols, block_rows = _pick_layout(x.shape, itemsize)
    x2d = x.reshape(rows, cols)

    out = pl.pallas_call(
        _identity_kernel,
        out_shape=jax.ShapeDtypeStruct((rows, cols), x.dtype),
        grid=(pl.cdiv(rows, block_rows),),
        in_specs=[pl.BlockSpec((block_rows, cols), lambda i: (i, 0))],
        out_specs=pl.BlockSpec((block_rows, cols), lambda i: (i, 0)),
        # Output aliases the input HBM buffer: with a donated input this is a
        # true in-place no-op; otherwise XLA preserves x with a single copy.
        input_output_aliases={0: 0},
        compiler_params=pltpu.CompilerParams(
            dimension_semantics=("parallel",),
            vmem_limit_bytes=_VMEM_LIMIT_BYTES,
        ),
    )(x2d)
    return out.reshape(x.shape)


_identity_copy_jit = jax.jit(_identity_copy)


def pca_model_forward(x, components, mean):
    """Pallas implementation of PcaModel.forward.

    components / mean mirror the nn.Module parameters but (exactly like the
    reference) they are unused by forward().  Callers that own `x` can wrap
    this in jax.jit(..., donate_argnums=0) to make the aliased copy zero-cost.
    """
    del components, mean  # parameters exist but forward() ignores them
    return _identity_copy_jit(x)


if __name__ == "__main__":
    key = jax.random.PRNGKey(0)
    k_x, k_c, k_m = jax.random.split(key, 3)

    n_samples, n_features, n_components = 16, 32, 3

    # Deterministic synthetic inputs / parameters (shapes as in __init__):
    #   components: [n_components, n_features], mean: [n_features]
    x = jax.random.normal(k_x, (n_samples, n_features), dtype=jnp.float32)
    components = jax.random.normal(
        k_c, (n_components, n_features), dtype=jnp.float32
    )
    mean = jax.random.normal(k_m, (n_features,), dtype=jnp.float32)

    out = pca_model_forward(x, components, mean)
    out = jax.block_until_ready(out)

    assert out.shape == x.shape and out.dtype == x.dtype
    assert bool(jnp.array_equal(out, x))
    print("KERNEL_OK")
</pallas_src>

<mosaic_0001>
module attributes {stable_mosaic.version = 11 : i64} {
  func.func @_identity_kernel(%arg0: i32, %arg1: memref<1x512xf32, #tpu.memory_space<vmem>>, %arg2: memref<1x512xf32, #tpu.memory_space<vmem>>) attributes {dimension_semantics = [#tpu.dimension_semantics<parallel>], iteration_bounds = array<i64: 1>, scalar_prefetch = 0 : i64, scratch_operands = 0 : i64, tpu.core_type = #tpu.core_type<tc>, window_params = [{transform_indices = @transform_0, window_bounds = array<i64: 1, 512>}, {transform_indices = @transform_1, window_bounds = array<i64: 1, 512>}]} {
    %c0 = arith.constant 0 : index
    %c0_0 = arith.constant 0 : index
    %0 = vector.load %arg1[%c0, %c0_0] : memref<1x512xf32, #tpu.memory_space<vmem>>, vector<1x512xf32>
    %c0_1 = arith.constant 0 : index
    %c0_2 = arith.constant 0 : index
    %1 = vector.load %arg2[%c0_1, %c0_2] : memref<1x512xf32, #tpu.memory_space<vmem>>, vector<1x512xf32>
    tpu.vector_store %arg2[%c0_1, %c0_2], %0 {strides = array<i32>} : memref<1x512xf32, #tpu.memory_space<vmem>>, vector<1x512xf32>,
    return
  }
  func.func @transform_0(%arg0: i32) -> (i32, i32) {
    %c0_i32 = arith.constant 0 : i32
    %c0_i32_0 = arith.constant 0 : i32
    return %arg0, %c0_i32 : i32, i32
  }
  func.func @transform_1(%arg0: i32) -> (i32, i32) {
    %c0_i32 = arith.constant 0 : i32
    %c0_i32_0 = arith.constant 0 : i32
    return %arg0, %c0_i32 : i32, i32
  }
}

</mosaic_0001>

<llo_original>
// kernel: _identity_copy.1
$region0: #{_identity_copy.1}
  #allocation0 [shape = 'u32[]', space=smem, size = 0x4, offset = 0x4, fixed_abs, tag = 'smem constant byte address 0x4 - core index']
  #allocation1 [shape = 'u32[144,128]{1,0:T(1,128)}', space=vmem, size = 0x12000, scoped, tag = 'internal scratch']
  %s0 = inlined_call_operand.vmem [shape: f32[1,512], index: 0, kind: input, shape index: {}, may-alias: {0,1}]
  %s1 = inlined_call_operand.vmem [shape: f32[1,512], index: 1, kind: output, shape index: {}, may-alias: {0,1}]
  %s2 = sld [smem:[#allocation0]]
  $region14: #{_identity_copy.1} parent=0
    _
  %s4 = ssub.s32 1, %s2
  %s5 = scalar_select 0, %s4, %s2
  // Predicated region
  $region2: #{_identity_copy.1} parent=0 // pred_check
    _
  $region3: #{_identity_copy.1} parent=0 // pred_check_branch
    %7 = sbr.rel (0) target = $region5
  $region4: #{_identity_copy.1} parent=0 // pred_region
    _
  $region5: #{_identity_copy.1} parent=0 // pred_fallthru
    _
  %v8 = vld [vmem:[%s0] sm:$0xf]
  %v9 = vlaneseq
  %vm10 = vcmp.ge.s32.totalorder %v9, 0
  %vm11 = vcmp.lt.s32.totalorder %v9, 512
  %vm12 = vmand %vm10, %vm11
  %13 = vst.msk [vmem:[%s1] sm:$0xf] %vm12, %v8
  // Predicated region
  $region6: #{_identity_copy.1} parent=0 // pred_check
    _
  $region7: #{_identity_copy.1} parent=0 // pred_check_branch
    %15 = sbr.rel (0) target = $region9
  $region8: #{_identity_copy.1} parent=0 // pred_region
    _
  $region9: #{_identity_copy.1} parent=0 // pred_fallthru
    _
  // Predicated region
  $region10: #{_identity_copy.1} parent=0 // pred_check
    _
  $region11: #{_identity_copy.1} parent=0 // pred_check_branch
    %17 = sbr.rel (0) target = $region13
  $region12: #{_identity_copy.1} parent=0 // pred_region
    _
  $region13: #{_identity_copy.1} parent=0 // pred_fallthru
    _

</llo_original>
